<compile_context>
chip_gen: v5e
topology: v5e:2x2
jax: 0.10.0
libtpu: 0.0.40
codegen_flags: <defaults>
</compile_context>

<pallas_src>
import jax
import jax.numpy as jnp
from jax.experimental import pallas as pl
from jax.experimental.pallas import tpu as pltpu


def _atae_attn_kernel(enc_ref, mask_ref, asp_ref, wenc_ref, wasp_ref, bias_ref,
                      out_ref):
    # enc_ref  : (BB, S, E)  encoder outputs (native dtype), this batch group
    # mask_ref : (BB, S)     f32 mask (1 = keep, 0 = masked), lane-dense
    # asp_ref  : (BB, A)     aspect embeddings (native dtype)
    # wenc_ref : (1, E)      linear-weight slice acting on encoder outputs
    # wasp_ref : (1, A)      linear-weight slice acting on the aspect embedding
    # bias_ref : (1, 1)      linear bias
    # out_ref  : (BB, P)     packed output: [:, :E] weighted, [:, E:E+S] weights
    BB, S, E = enc_ref.shape
    P = out_ref.shape[-1]

    enc = enc_ref[...].astype(jnp.float32)                   # (BB, S, E)
    asp = asp_ref[...].astype(jnp.float32)                   # (BB, A)
    w_enc = wenc_ref[...].astype(jnp.float32)                # (1, E)
    w_asp = wasp_ref[...].astype(jnp.float32)                # (1, A)
    bias = bias_ref[...].astype(jnp.float32)                 # (1, 1)

    # attention logits: VPU multiply + lane (E) reduce -> (BB, S)
    scores = jnp.sum(enc * w_enc[None, :, :], axis=-1)
    # fused aspect/bias contribution (constant over the sequence axis)
    asp_bias = jnp.sum(asp * w_asp, axis=-1, keepdims=True) + bias   # (BB, 1)
    scores = scores + asp_bias
    # additive mask: masked positions get ~-1e9 added
    scores = scores + (mask_ref[...] - 1.0) * 1e9

    # numerically-stable softmax over the sequence (lane) axis
    m = jnp.max(scores, axis=-1, keepdims=True)              # (BB, 1)
    e = jnp.exp(scores - m)                                  # (BB, S)
    denom = jnp.sum(e, axis=-1, keepdims=True)               # (BB, 1)
    w = e * pl.reciprocal(denom, approx=False)               # (BB, S)

    # weighted output: broadcast multiply + sublane (S) reduce, E on lanes
    weighted = jnp.sum(w[:, :, None] * enc, axis=1)          # (BB, E)

    # pack into one lane-dense (BB, P) slab; HBM writeback is a single
    # full-width DMA per grid step.
    out_ref[:, :E] = weighted.astype(out_ref.dtype)
    out_ref[:, E:E + S] = w.astype(out_ref.dtype)
    if P > E + S:  # static
        out_ref[:, E + S:] = jnp.zeros((BB, P - E - S), out_ref.dtype)


def _round_up(x, m):
    return ((x + m - 1) // m) * m


def _tpu_vmem_capacity():
    try:
        cap = getattr(pltpu.get_tpu_info(), "vmem_capacity_bytes", None)
        if cap:
            return int(cap)
    except Exception:
        pass
    return 64 << 20  # conservative fallback: v7x per-TensorCore budget


def _choose_block_b(B, S, E, itemsize, align, vmem_cap):
    """Batch-group size: aligned to the dtype's sublane packing, sized per
    generation (bigger blocks on 128 MiB-VMEM parts), split into >=4 grid
    steps only on v7x-class (2 TensorCore) parts."""
    small_vmem = vmem_cap < (96 << 20)            # v7x-class: 64 MiB per TC
    target = (4 << 20) if small_vmem else (12 << 20)
    # per-row VMEM demand: double-buffered native block + f32 working copies
    per_row = max(S * E * (2 * itemsize + 8), 1)
    bb = max(1, target // per_row)
    if bb >= B:
        return B
    bb = max(align, (bb // align) * align)
    if bb >= B:
        return B
    if small_vmem and B >= 4 * align:
        # v7x: the "parallel" grid axis shards over 2 TCs; aim for >= 4 steps.
        cap_bb = max(align, _round_up(-(-B // 4), align))
        bb = min(bb, cap_bb)
        if bb >= B:
            return B
    return bb


def atae_attention(encoder_outputs, aspect_embedding, weight, bias,
                   mask=None, block_b=None):
    """Pallas implementation of ATAEAttentionLayer.forward.

    encoder_outputs : (B, S, E) f32 or bf16
    aspect_embedding: (B, A)
    weight          : (1, E + A)  (nn.Linear weight, concat order [enc, aspect])
    bias            : (1,)
    mask            : (B, S) or None (nonzero = keep, 0 = masked)
    Returns (weighted_output (B, E), attention_weights (B, S)) in
    encoder_outputs.dtype.
    """
    B, S, E = encoder_outputs.shape
    A = aspect_embedding.shape[-1]
    assert weight.shape == (1, E + A)

    out_dtype = encoder_outputs.dtype
    w_enc = weight[:, :E]                                     # (1, E)
    w_asp = weight[:, E:]                                     # (1, A)
    bias_arr = jnp.reshape(jnp.asarray(bias, dtype=jnp.float32), (1, 1))

    if mask is None:
        mask_f = jnp.ones((B, S), dtype=jnp.float32)
    else:
        mask_f = (mask != 0).astype(jnp.float32)

    enc_itemsize = jnp.dtype(encoder_outputs.dtype).itemsize
    min_itemsize = min(enc_itemsize, jnp.dtype(aspect_embedding.dtype).itemsize)
    align = max(8, 32 // max(min_itemsize, 1))                # 8 f32 / 16 bf16
    vmem_cap = _tpu_vmem_capacity()

    if block_b is not None:
        BB = int(block_b)
    else:
        BB = _choose_block_b(B, S, E, enc_itemsize, align, vmem_cap)
    BB = min(BB, B)
    if BB < B and BB % align:
        BB = min(B, max(align, (BB // align) * align))

    grid = (pl.cdiv(B, BB),)                                  # no padding of B
    P = _round_up(E + S, 128)                                 # lane-dense slab

    # VMEM budget: double-buffered native enc block + f32 working set + misc,
    # capped at 85% of the physical per-core VMEM (64 MiB on v7x).
    work = (BB * S * E * (2 * enc_itemsize + 12)
            + 4 * BB * (4 * S + 3 * E + 2 * A + 2 * P)
            + (4 << 20))
    vmem_limit = int(min(max(work, 32 << 20), int(0.85 * vmem_cap)))

    packed = pl.pallas_call(
        _atae_attn_kernel,
        out_shape=jax.ShapeDtypeStruct((B, P), out_dtype),
        grid=grid,
        in_specs=[
            pl.BlockSpec((BB, S, E), lambda i: (i, 0, 0)),    # encoder outputs
            pl.BlockSpec((BB, S), lambda i: (i, 0)),          # mask (lane-dense)
            pl.BlockSpec((BB, A), lambda i: (i, 0)),          # aspect embedding
            pl.BlockSpec((1, E), lambda i: (0, 0)),           # w_enc (resident)
            pl.BlockSpec((1, A), lambda i: (0, 0)),           # w_asp (resident)
            pl.BlockSpec((1, 1), lambda i: (0, 0)),           # bias  (resident)
        ],
        out_specs=pl.BlockSpec((BB, P), lambda i: (i, 0)),
        compiler_params=pltpu.CompilerParams(
            dimension_semantics=("parallel",),
            vmem_limit_bytes=vmem_limit,
        ),
    )(encoder_outputs, mask_f, aspect_embedding, w_enc, w_asp, bias_arr)

    weighted = packed[:, :E]
    attn_w = packed[:, E:E + S]
    return weighted, attn_w

    # TODO(synk): for E << 128 a (B, S*E) lane-dense layout with an in-lane
    # strided reduction (pltpu.roll) would avoid lane underfill; skipped here
    # to keep the kernel simple and robust across shapes.


def _reference(encoder_outputs, aspect_embedding, weight, bias, mask=None):
    # Pure-JAX reference mirroring the PyTorch forward.
    B, S, E = encoder_outputs.shape
    aspect_rep = jnp.repeat(aspect_embedding[:, None, :], S, axis=1)
    combined = jnp.concatenate([encoder_outputs, aspect_rep], axis=2)
    scores = jnp.einsum('bsf,of->bso', combined, weight)[..., 0] + bias[0]
    if mask is not None:
        scores = jnp.where(mask == 0, -1e9, scores)
    w = jax.nn.softmax(scores, axis=1)
    weighted = jnp.einsum('bs,bse->be', w, encoder_outputs)
    return weighted, w


if __name__ == "__main__":
    # Shapes consistent with the module: hidden_dim=16,
    # enc_dim = asp_dim = 2 * hidden_dim = 32, so the Linear is 64 -> 1.
    hidden_dim = 16
    B, S = 2, 8
    E = A = 2 * hidden_dim

    key = jax.random.PRNGKey(0)
    k1, k2, k3, k4 = jax.random.split(key, 4)
    enc = jax.random.normal(k1, (B, S, E), dtype=jnp.float32)
    asp = jax.random.normal(k2, (B, A), dtype=jnp.float32)
    weight = jax.random.normal(k3, (1, E + A), dtype=jnp.float32) * 0.1
    bias = jax.random.normal(k4, (1,), dtype=jnp.float32) * 0.1
    mask = jnp.ones((B, S), dtype=jnp.float32).at[1, -2:].set(0.0)

    out, attn = atae_attention(enc, asp, weight, bias, mask)
    jax.block_until_ready((out, attn))
    ref_out, ref_w = _reference(enc, asp, weight, bias, mask)
    assert jnp.allclose(out, ref_out, atol=1e-5, rtol=1e-5)
    assert jnp.allclose(attn, ref_w, atol=1e-5, rtol=1e-5)

    # mask=None path
    out_nm, attn_nm = atae_attention(enc, asp, weight, bias, None)
    jax.block_until_ready((out_nm, attn_nm))
    ref_out_nm, ref_w_nm = _reference(enc, asp, weight, bias, None)
    assert jnp.allclose(out_nm, ref_out_nm, atol=1e-5, rtol=1e-5)
    assert jnp.allclose(attn_nm, ref_w_nm, atol=1e-5, rtol=1e-5)

    # Multi-step grid with a partial tail block (B % BB != 0, no wrapper pad).
    hd2 = 32
    B2, S2 = 20, 16
    E2 = A2 = 2 * hd2
    k5, k6, k7, k8, k9 = jax.random.split(jax.random.PRNGKey(1), 5)
    enc2 = jax.random.normal(k5, (B2, S2, E2), dtype=jnp.float32)
    asp2 = jax.random.normal(k6, (B2, A2), dtype=jnp.float32)
    w2 = jax.random.normal(k7, (1, E2 + A2), dtype=jnp.float32) * 0.1
    b2 = jax.random.normal(k8, (1,), dtype=jnp.float32) * 0.1
    mask2 = (jax.random.uniform(k9, (B2, S2)) > 0.2).astype(jnp.float32)
    mask2 = mask2.at[:, 0].set(1.0)  # keep at least one valid position per row

    out2, attn2 = atae_attention(enc2, asp2, w2, b2, mask2, block_b=8)
    jax.block_until_ready((out2, attn2))
    ref_out2, ref_w2 = _reference(enc2, asp2, w2, b2, mask2)
    assert jnp.allclose(out2, ref_out2, atol=1e-5, rtol=1e-5)
    assert jnp.allclose(attn2, ref_w2, atol=1e-5, rtol=1e-5)

    # bf16 inputs stay bf16 in HBM (no wrapper upcast); kernel casts after load.
    enc_bf = enc2.astype(jnp.bfloat16)
    asp_bf = asp2.astype(jnp.bfloat16)
    out_bf, attn_bf = atae_attention(enc_bf, asp_bf, w2, b2, mask2, block_b=16)
    jax.block_until_ready((out_bf, attn_bf))
    ref_out_bf, ref_w_bf = _reference(enc_bf.astype(jnp.float32),
                                      asp_bf.astype(jnp.float32), w2, b2, mask2)
    assert jnp.allclose(out_bf.astype(jnp.float32), ref_out_bf,
                        atol=1e-2, rtol=1e-2)
    assert jnp.allclose(attn_bf.astype(jnp.float32), ref_w_bf,
                        atol=1e-2, rtol=1e-2)

    print("KERNEL_OK")
</pallas_src>

<mosaic_0001>
module attributes {stable_mosaic.version = 11 : i64} {
  func.func @_atae_attn_kernel(%arg0: i32, %arg1: memref<2x8x32xf32, #tpu.memory_space<vmem>>, %arg2: memref<2x8xf32, #tpu.memory_space<vmem>>, %arg3: memref<2x32xf32, #tpu.memory_space<vmem>>, %arg4: memref<1x32xf32, #tpu.memory_space<vmem>>, %arg5: memref<1x32xf32, #tpu.memory_space<vmem>>, %arg6: memref<1x1xf32, #tpu.memory_space<vmem>>, %arg7: memref<2x128xf32, #tpu.memory_space<vmem>>) attributes {dimension_semantics = [#tpu.dimension_semantics<parallel>], iteration_bounds = array<i64: 1>, scalar_prefetch = 0 : i64, scratch_operands = 0 : i64, tpu.core_type = #tpu.core_type<tc>, window_params = [{transform_indices = @transform_0, window_bounds = array<i64: 2, 8, 32>}, {transform_indices = @transform_1, window_bounds = array<i64: 2, 8>}, {transform_indices = @transform_2, window_bounds = array<i64: 2, 32>}, {pipeline_mode = #tpu.pipeline_mode<synchronous>, transform_indices = @transform_3, window_bounds = array<i64: 1, 32>}, {pipeline_mode = #tpu.pipeline_mode<synchronous>, transform_indices = @transform_4, window_bounds = array<i64: 1, 32>}, {pipeline_mode = #tpu.pipeline_mode<synchronous>, transform_indices = @transform_5, window_bounds = array<i64: 1, 1>}, {transform_indices = @transform_6, window_bounds = array<i64: 2, 128>}]} {
    %c0 = arith.constant 0 : index
    %c0_0 = arith.constant 0 : index
    %c0_1 = arith.constant 0 : index
    %0 = vector.load %arg1[%c0, %c0_0, %c0_1] : memref<2x8x32xf32, #tpu.memory_space<vmem>>, vector<2x8x32xf32>
    %c0_2 = arith.constant 0 : index
    %c0_3 = arith.constant 0 : index
    %1 = vector.load %arg3[%c0_2, %c0_3] : memref<2x32xf32, #tpu.memory_space<vmem>>, vector<2x32xf32>
    %c0_4 = arith.constant 0 : index
    %c0_5 = arith.constant 0 : index
    %2 = vector.load %arg4[%c0_4, %c0_5] : memref<1x32xf32, #tpu.memory_space<vmem>>, vector<1x32xf32>
    %c0_6 = arith.constant 0 : index
    %c0_7 = arith.constant 0 : index
    %3 = vector.load %arg5[%c0_6, %c0_7] : memref<1x32xf32, #tpu.memory_space<vmem>>, vector<1x32xf32>
    %c0_8 = arith.constant 0 : index
    %c0_9 = arith.constant 0 : index
    %4 = vector.load %arg6[%c0_8, %c0_9] : memref<1x1xf32, #tpu.memory_space<vmem>>, vector<1x1xf32>
    %5 = vector.shape_cast %2 : vector<1x32xf32> to vector<1x1x32xf32>
    %6 = vector.broadcast %5 : vector<1x1x32xf32> to vector<2x8x32xf32>
    %7 = arith.mulf %0, %6 : vector<2x8x32xf32>
    %cst = arith.constant dense<0.000000e+00> : vector<2x8xf32>
    %8 = vector.multi_reduction <add>, %7, %cst [2] : vector<2x8x32xf32> to vector<2x8xf32>
    %9 = vector.broadcast %3 : vector<1x32xf32> to vector<2x32xf32>
    %10 = arith.mulf %1, %9 : vector<2x32xf32>
    %cst_10 = arith.constant dense<0.000000e+00> : vector<2xf32>
    %11 = vector.multi_reduction <add>, %10, %cst_10 [1] : vector<2x32xf32> to vector<2xf32>
    %12 = vector.shape_cast %11 : vector<2xf32> to vector<2x1xf32>
    %13 = vector.broadcast %4 : vector<1x1xf32> to vector<2x1xf32>
    %14 = arith.addf %12, %13 : vector<2x1xf32>
    %15 = vector.broadcast %14 : vector<2x1xf32> to vector<2x8xf32>
    %16 = arith.addf %8, %15 : vector<2x8xf32>
    %c0_11 = arith.constant 0 : index
    %c0_12 = arith.constant 0 : index
    %17 = vector.load %arg2[%c0_11, %c0_12] : memref<2x8xf32, #tpu.memory_space<vmem>>, vector<2x8xf32>
    %cst_13 = arith.constant 1.000000e+00 : f32
    %18 = vector.broadcast %cst_13 : f32 to vector<2x8xf32>
    %19 = arith.subf %17, %18 : vector<2x8xf32>
    %cst_14 = arith.constant 1.000000e+09 : f32
    %20 = vector.broadcast %cst_14 : f32 to vector<2x8xf32>
    %21 = arith.mulf %19, %20 : vector<2x8xf32>
    %22 = arith.addf %16, %21 : vector<2x8xf32>
    %cst_15 = arith.constant dense<0xFF800000> : vector<2xf32>
    %23 = vector.multi_reduction <maximumf>, %22, %cst_15 [1] : vector<2x8xf32> to vector<2xf32>
    %24 = vector.shape_cast %23 : vector<2xf32> to vector<2x1xf32>
    %25 = vector.broadcast %24 : vector<2x1xf32> to vector<2x8xf32>
    %26 = arith.subf %22, %25 : vector<2x8xf32>
    %27 = math.exp %26 : vector<2x8xf32>
    %cst_16 = arith.constant dense<0.000000e+00> : vector<2xf32>
    %28 = vector.multi_reduction <add>, %27, %cst_16 [1] : vector<2x8xf32> to vector<2xf32>
    %29 = vector.shape_cast %28 : vector<2xf32> to vector<2x1xf32>
    %30 = tpu.reciprocal %29 : vector<2x1xf32> -> vector<2x1xf32>
    %31 = vector.broadcast %30 : vector<2x1xf32> to vector<2x8xf32>
    %32 = arith.mulf %27, %31 : vector<2x8xf32>
    %33 = vector.shape_cast %32 : vector<2x8xf32> to vector<2x8x1xf32>
    %34 = vector.broadcast %33 : vector<2x8x1xf32> to vector<2x8x32xf32>
    %35 = arith.mulf %34, %0 : vector<2x8x32xf32>
    %cst_17 = arith.constant dense<0.000000e+00> : vector<2x32xf32>
    %36 = vector.multi_reduction <add>, %35, %cst_17 [1] : vector<2x8x32xf32> to vector<2x32xf32>
    %c0_18 = arith.constant 0 : index
    %c0_19 = arith.constant 0 : index
    %37 = vector.load %arg7[%c0_18, %c0_19] : memref<2x128xf32, #tpu.memory_space<vmem>>, vector<2x32xf32>
    tpu.vector_store %arg7[%c0_18, %c0_19], %36 {strides = array<i32>} : memref<2x128xf32, #tpu.memory_space<vmem>>, vector<2x32xf32>,
    %c0_20 = arith.constant 0 : index
    %c32 = arith.constant 32 : index
    %38 = vector.load %arg7[%c0_20, %c32] : memref<2x128xf32, #tpu.memory_space<vmem>>, vector<2x8xf32>
    tpu.vector_store %arg7[%c0_20, %c32], %32 {strides = array<i32>} : memref<2x128xf32, #tpu.memory_space<vmem>>, vector<2x8xf32>,
    %cst_21 = arith.constant 0.000000e+00 : f32
    %39 = vector.broadcast %cst_21 : f32 to vector<2x88xf32>
    %c0_22 = arith.constant 0 : index
    %c40 = arith.constant 40 : index
    %40 = vector.load %arg7[%c0_22, %c40] : memref<2x128xf32, #tpu.memory_space<vmem>>, vector<2x88xf32>
    tpu.vector_store %arg7[%c0_22, %c40], %39 {strides = array<i32>} : memref<2x128xf32, #tpu.memory_space<vmem>>, vector<2x88xf32>,
    return
  }
  func.func @transform_0(%arg0: i32) -> (i32, i32, i32) {
    %c0_i32 = arith.constant 0 : i32
    %c0_i32_0 = arith.constant 0 : i32
    %c0_i32_1 = arith.constant 0 : i32
    return %arg0, %c0_i32, %c0_i32_0 : i32, i32, i32
  }
  func.func @transform_1(%arg0: i32) -> (i32, i32) {
    %c0_i32 = arith.constant 0 : i32
    %c0_i32_0 = arith.constant 0 : i32
    return %arg0, %c0_i32 : i32, i32
  }
  func.func @transform_2(%arg0: i32) -> (i32, i32) {
    %c0_i32 = arith.constant 0 : i32
    %c0_i32_0 = arith.constant 0 : i32
    return %arg0, %c0_i32 : i32, i32
  }
  func.func @transform_3(%arg0: i32) -> (i32, i32) {
    %c0_i32 = arith.constant 0 : i32
    %c0_i32_0 = arith.constant 0 : i32
    %c0_i32_1 = arith.constant 0 : i32
    return %c0_i32, %c0_i32_0 : i32, i32
  }
  func.func @transform_4(%arg0: i32) -> (i32, i32) {
    %c0_i32 = arith.constant 0 : i32
    %c0_i32_0 = arith.constant 0 : i32
    %c0_i32_1 = arith.constant 0 : i32
    return %c0_i32, %c0_i32_0 : i32, i32
  }
  func.func @transform_5(%arg0: i32) -> (i32, i32) {
    %c0_i32 = arith.constant 0 : i32
    %c0_i32_0 = arith.constant 0 : i32
    %c0_i32_1 = arith.constant 0 : i32
    return %c0_i32, %c0_i32_0 : i32, i32
  }
  func.func @transform_6(%arg0: i32) -> (i32, i32) {
    %c0_i32 = arith.constant 0 : i32
    %c0_i32_0 = arith.constant 0 : i32
    return %arg0, %c0_i32 : i32, i32
  }
}

</mosaic_0001>

<llo_original>
// kernel: tpu_custom_call.1
$region0: #{tpu_custom_call.1}
  #allocation0 [shape = 'u32[]', space=smem, size = 0x4, offset = 0x4, fixed_abs, tag = 'smem constant byte address 0x4 - core index']
  #allocation1 [shape = 'u32[72,128]{1,0:T(1,128)}', space=vmem, size = 0x9000, scoped, tag = 'internal scratch']
  #allocation2 [shape = 'f32[1,1]{1,0:T(1,128)S(1)}', space=vmem, size = 0x200, scoped, tag = 'scoped memory for tpu_custom_call.1']
  %s0 = inlined_call_operand.hbm [shape: f32[2,8,32], index: 0, kind: input, shape index: {}]
  %s1 = inlined_call_operand.vmem [shape: f32[2,8], index: 1, kind: input, shape index: {}]
  %s2 = inlined_call_operand.hbm [shape: f32[2,32], index: 2, kind: input, shape index: {}]
  %s3 = inlined_call_operand.vmem [shape: f32[1,32], index: 3, kind: input, shape index: {}]
  %s4 = inlined_call_operand.vmem [shape: f32[1,32], index: 4, kind: input, shape index: {}]
  %s5 = inlined_call_operand.<no memory space> [shape: f32[1,1], index: 5, kind: input, shape index: {}]
  %s6 = inlined_call_operand.hbm [shape: f32[2,128], index: 6, kind: output, shape index: {}]
  %s7 = sld [smem:[#allocation0]]
  $region42: #{tpu_custom_call.1} parent=0
    _
  %s9 = ssub.s32 1, %s7
  %s10 = scalar_select 0, %s9, %s7
  %v11 = vstv %s5
  %12 = vst [vmem:[#allocation2] sm:$0x1] %v11
  $region1: #{tpu_custom_call.1} parent=0
    #allocation3 [shape = 'u8[8192]{0}', space=vmem, size = 0x2000, scoped, tag = 'input window, operand 0, single buffered']
    #allocation4 [shape = 's32[1]{0}', space=sflag, size = 0x4, scoped, tag = 'scoped memory for tpu_custom_call.1']
    #allocation5 [shape = 's32[1]{0}', space=sflag, size = 0x4, scoped, tag = 'scoped memory for tpu_custom_call.1']
    #allocation6 [shape = 'u8[1024]{0}', space=vmem, size = 0x400, scoped, tag = 'input window, operand 2, single buffered']
    #allocation7 [shape = 's32[1]{0}', space=sflag, size = 0x4, scoped, tag = 'scoped memory for tpu_custom_call.1']
    #allocation8 [shape = 'u8[1024]{0}', space=vmem, size = 0x400, scoped, tag = 'output window, operand 0, single buffered']
    %13 = vsyncpa [#allocation4], 0
    %14 = vsyncpa [#allocation7], 0
    %15 = vsyncpa [#allocation5], 0
    // Predicated region
    $region2: #{tpu_custom_call.1} parent=1 // pred_check
      _
    $region3: #{tpu_custom_call.1} parent=1 // pred_check_branch
      %17 = sbr.rel (0) target = $region5
    $region4: #{tpu_custom_call.1} parent=1 // pred_region
      %19 = vsyncadd [#allocation4], 0
      %s20 = sshll.u32 %s0, 4
      %s21 = int_to_ptr.hbm [resolvable:$true] %s20
      %s22 = sshll.u32 [#allocation3], 4
      %s23 = int_to_ptr.vmem [resolvable:$true] %s22
      %28 = dma.hbm_to_vmem [thread:$0]  %s21, 256, %s23, [#allocation4], 128, 128, 8
    $region5: #{tpu_custom_call.1} parent=1 // pred_fallthru
      _
    // Predicated region
    $region6: #{tpu_custom_call.1} parent=1 // pred_check
      _
    $region7: #{tpu_custom_call.1} parent=1 // pred_check_branch
      %30 = sbr.rel (0) target = $region9
    $region8: #{tpu_custom_call.1} parent=1 // pred_region
      _
    $region9: #{tpu_custom_call.1} parent=1 // pred_fallthru
      _
    // Predicated region
    $region10: #{tpu_custom_call.1} parent=1 // pred_check
      _
    $region11: #{tpu_custom_call.1} parent=1 // pred_check_branch
      %32 = sbr.rel (0) target = $region13
    $region12: #{tpu_custom_call.1} parent=1 // pred_region
      %34 = vsyncadd [#allocation7], 0
      %s36 = sshll.u32 %s2, 4
      %s37 = int_to_ptr.hbm [resolvable:$true] %s36
      %s38 = sshll.u32 [#allocation6], 4
      %s39 = int_to_ptr.vmem [resolvable:$true] %s38
      %41 = dma.hbm_to_vmem [thread:$0]  %s37, 32, %s39, [#allocation7]
    $region13: #{tpu_custom_call.1} parent=1 // pred_fallthru
      _
    // Predicated region
    $region14: #{tpu_custom_call.1} parent=1 // pred_check
      _
    $region15: #{tpu_custom_call.1} parent=1 // pred_check_branch
      %43 = sbr.rel (0) target = $region17
    $region16: #{tpu_custom_call.1} parent=1 // pred_region
      _
    $region17: #{tpu_custom_call.1} parent=1 // pred_fallthru
      _
    // Predicated region
    $region18: #{tpu_custom_call.1} parent=1 // pred_check
      _
    $region19: #{tpu_custom_call.1} parent=1 // pred_check_branch
      %45 = sbr.rel (0) target = $region21
    $region20: #{tpu_custom_call.1} parent=1 // pred_region
      _
    $region21: #{tpu_custom_call.1} parent=1 // pred_fallthru
      _
    // Predicated region
    $region22: #{tpu_custom_call.1} parent=1 // pred_check
      _
    $region23: #{tpu_custom_call.1} parent=1 // pred_check_branch
      %47 = sbr.rel (0) target = $region25
    $region24: #{tpu_custom_call.1} parent=1 // pred_region
      _
    $region25: #{tpu_custom_call.1} parent=1 // pred_fallthru
      _
    // Predicated region
    $region26: #{tpu_custom_call.1} parent=1 // pred_check
      _
    $region27: #{tpu_custom_call.1} parent=1 // pred_check_branch
      %49 = sbr.rel (0) target = $region29
    $region28: #{tpu_custom_call.1} parent=1 // pred_region
      %51 = dma.done [#allocation4], 256
    $region29: #{tpu_custom_call.1} parent=1 // pred_fallthru
      _
    // Predicated region
    $region30: #{tpu_custom_call.1} parent=1 // pred_check
      _
    $region31: #{tpu_custom_call.1} parent=1 // pred_check_branch
      %53 = sbr.rel (0) target = $region33
    $region32: #{tpu_custom_call.1} parent=1 // pred_region
      %55 = dma.done [#allocation7], 32
    $region33: #{tpu_custom_call.1} parent=1 // pred_fallthru
      _
    %v56 = vld [vmem:[#allocation3] sm:$0xff]
    %v57 = vld [vmem:[#allocation3 + $0x8] sm:$0xff]
    %v58 = vld [vmem:[#allocation6] sm:$0x3]
    %v59 = vld [vmem:[%s3] sm:$0x1]
    %v60 = vld [vmem:[%s4] sm:$0x1]
    %v61 = vld [vmem:[#allocation2] sm:$0x1]
    %v63 = vperm.slane %v59, 0
    %v65 = vmul.f32 %v56, %v63
    %v66 = vmul.f32 %v57, %v63
    %vm67 = vcmask 261120
    %v68 = vsel %vm67, %v65, 0.0
    %69 = vadd.xlane.f32.xlu0 %v68
    %v70 = vpop.xlane.xlu0 %69
    %v71 = vsel %vm67, %v66, 0.0
    %72 = vadd.xlane.f32.xlu0 %v71
    %v73 = vpop.xlane.xlu0 %72
    %v75 = vperm.slane %v60, 0
    %v77 = vmul.f32 %v58, %v75
    %vm78 = vcmask 254976
    %v79 = vsel %vm78, %v77, 0.0
    %80 = vadd.xlane.f32.xlu0 %v79
    %v81 = vpop.xlane.xlu0 %80
    %v83 = vperm.slane %v61, 0
    %v85 = vadd.f32 %v81, %v83
    %87 = vset.pattern.permute.xlu0 0
    %88 = vperm.xlu0 %87, %v85
    %v89 = vpop.permute.xlu0 %88
    %v90 = vperm.slane %v89, 0
    %v91 = vperm.slane %v89, 1
    %v94 = vadd.f32 %v70, %v90
    %v95 = vadd.f32 %v73, %v91
    %v96 = vld [vmem:[%s1] sm:$0x3]
    %v97 = vsub.f32 %v96, 1.0
    %v98 = vmul.f32 %v97, 1e+09
    %v100 = vperm.slane %v98, 0
    %v101 = vlaneseq
    %v102 = vshrl.u32 %v101, 7
    %104 = vset.pattern.permute.xlu0 %v102
    %105 = vperm.xlu0 %104, %v100
    %v106 = vpop.permute.xlu0 %105
    %v107 = vperm.slane %v98, 1
    %v108 = vlaneseq
    %v109 = vshrl.u32 %v108, 7
    %111 = vset.pattern.permute.xlu0 %v109
    %112 = vperm.xlu0 %111, %v107
    %v113 = vpop.permute.xlu0 %112
    %v116 = vadd.f32 %v94, %v106
    %v117 = vadd.f32 %v95, %v113
    %120 = vset.pattern.permute.xlu0 0
    %121 = vperm.xlu0 %120, %v116
    %v122 = vpop.permute.xlu0 %121
    %123 = vset.pattern.permute.xlu0 0
    %124 = vperm.xlu0 %123, %v117
    %v125 = vpop.permute.xlu0 %124
    %v126 = vlaneseq
    %v127 = vand.u32 %v126, 127
    %v128 = vperm.slane %v122, %v127
    %v129 = vperm.slane %v125, %v127
    %vm130 = vcmask 1041409
    %v131 = vsel %vm130, %v129, %v128
    %vm133 = vcmask 58368
    %v134 = vsel %vm133, %v131, -inf
    %135 = vmax.xlane.f32.xlu0 %v134
    %v136 = vpop.xlane.xlu0 %135
    %v138 = vperm.slane %v136, 0
    %v139 = vperm.slane %v136, 1
    %v142 = vsub.f32 %v116, %v138
    %v143 = vsub.f32 %v117, %v139
    %v144 = vmul.f32 %v142, 1.442695
    %v145 = vpow.pop %v144
    %v146 = vmul.f32 %v143, 1.442695
    %v147 = vpow.pop %v146
    %150 = vset.pattern.permute.xlu0 0
    %151 = vperm.xlu0 %150, %v145
    %v152 = vpop.permute.xlu0 %151
    %153 = vset.pattern.permute.xlu0 0
    %154 = vperm.xlu0 %153, %v147
    %v155 = vpop.permute.xlu0 %154
    %v156 = vperm.slane %v152, %v127
    %v157 = vperm.slane %v155, %v127
    %v158 = vsel %vm130, %v157, %v156
    %v160 = vsel %vm133, %v158, 0.0
    %161 = vadd.xlane.f32.xlu0 %v160
    %v162 = vpop.xlane.xlu0 %161
    %v163 = vrcp.pop %v162
    %v164 = vmul.f32 %v162, %v163
    %v165 = vsub.f32 1.0, %v164
    %v166 = vmul.f32 %v163, %v165
    %v167 = vadd.f32 %v163, %v166
    %vm168 = vweird.f32 %v162
    %vm169 = vweird.f32 %v163
    %vm170 = vmor %vm168, %vm169
    %v171 = vsel %vm170, %v163, %v167
    %v172 = vand.u32 2147483647, %v162
    %vm173 = vcmp.eq.f32.partialorder %v172, 8.507059e+37
    %v174 = vand.u32 %v162, 2147483648
    %v175 = vor.u32 1.1754944e-38, %v174
    %v176 = vsel %vm173, %v175, %v171
    %v178 = vperm.slane %v176, 0
    %v179 = vperm.slane %v176, 1
    %v182 = vmul.f32 %v145, %v178
    %v183 = vmul.f32 %v147, %v179
    %185 = vset.pattern.permute.xlu0 0
    %186 = vperm.xlu0 %185, %v182
    %v187 = vpop.permute.xlu0 %186
    %190 = vset.pattern.permute.xlu0 0
    %191 = vperm.xlu0 %190, %v183
    %v192 = vpop.permute.xlu0 %191
    %v194 = vmul.f32 %v187, %v56
    %v195 = vmul.f32 %v192, %v57
    %v196 = vsel %vm67, %v194, 0.0
    %v197 = vrot.slane %v196, 4
    %v198 = vadd.f32 %v196, %v197
    %v199 = vrot.slane %v198, 2
    %v200 = vadd.f32 %v198, %v199
    %v201 = vrot.slane %v200, 1
    %v202 = vadd.f32 %v200, %v201
    %v203 = vsel %vm67, %v195, 0.0
    %v204 = vrot.slane %v203, 4
    %v205 = vadd.f32 %v203, %v204
    %v206 = vrot.slane %v205, 2
    %v207 = vadd.f32 %v205, %v206
    %v208 = vrot.slane %v207, 1
    %v209 = vadd.f32 %v207, %v208
    %v212 = vsel %vm130, %v209, %v202
    %214 = vst.msk [vmem:[#allocation8] sm:$0x3] %vm78, %v212
    %v215 = vadd.s32 %v127, 4294967264
    %v216 = vperm.slane %v187, %v215
    %v217 = vperm.slane %v192, %v215
    %v218 = vsel %vm130, %v217, %v216
    %vm220 = vcmask 320768
    %221 = vst.msk [vmem:[#allocation8] sm:$0x3] %vm220, %v218
    %vm222 = vcmask 1041728
    %223 = vst.msk [vmem:[#allocation8] sm:$0x3] %vm222, 0.0
    // Predicated region
    $region34: #{tpu_custom_call.1} parent=1 // pred_check
      _
    $region35: #{tpu_custom_call.1} parent=1 // pred_check_branch
      %225 = sbr.rel (0) target = $region37
    $region36: #{tpu_custom_call.1} parent=1 // pred_region
      %227 = vsyncadd [#allocation5], 0
      %s229 = sshll.u32 [#allocation8], 4
      %s230 = int_to_ptr.vmem [resolvable:$true] %s229
      %s231 = sshll.u32 %s6, 4
      %s232 = int_to_ptr.hbm [resolvable:$true] %s231
      %234 = dma.vmem_to_hbm [thread:$0]  %s230, 32, %s232, [#allocation5]
    $region37: #{tpu_custom_call.1} parent=1 // pred_fallthru
      _
    // Predicated region
    $region38: #{tpu_custom_call.1} parent=1 // pred_check
      _
    $region39: #{tpu_custom_call.1} parent=1 // pred_check_branch
      %236 = sbr.rel (0) target = $region41
    $region40: #{tpu_custom_call.1} parent=1 // pred_region
      %238 = dma.done [#allocation5], 32
    $region41: #{tpu_custom_call.1} parent=1 // pred_fallthru
      _
    %239 = vsyncpa [#allocation4], 1
    %240 = vsyncpa [#allocation7], 1
    %241 = vsyncpa [#allocation5], 1

</llo_original>
